<compile_context>
chip_gen: v7x
topology: tpu7x:2x2x1
jax: 0.10.0
libtpu: 0.0.40
codegen_flags: <defaults>
</compile_context>

<pallas_src>
import jax
import jax.numpy as jnp
from jax.experimental import pallas as pl
from jax.experimental.pallas import tpu as pltpu


DEFAULT_TILE_M = 1024  # lane-dim tile (multiple of 128); 512-2048 per guidance


def _round_up(x, m):
    return (x + m - 1) // m * m


def det_head_kernel(x_ref, w1t_ref, bias_ref, w2t_ref, b2_ref, out_ref):
    """Fused 1x1 conv -> folded BN -> ReLU -> 1x1 pred conv on one tile.

    Channels-on-sublane / positions-on-lane layout:
      x_ref:    (1, Cin, TILE_M)  bf16
      w1t_ref:  (Ch, Cin)         bf16   (BN scale pre-folded)
      bias_ref: (Ch, 1)           f32    (folded BN bias)
      w2t_ref:  (K, Ch)           f32
      b2_ref:   (K, 1)            f32
      out_ref:  (1, K, TILE_M)    f32
    """
    x = x_ref[0]                                                    # (Cin, TILE_M)
    h = jnp.dot(w1t_ref[...], x, preferred_element_type=jnp.float32)  # (Ch, TILE_M)
    h = jnp.maximum(h + bias_ref[...], 0.0)                         # BN bias + ReLU (f32)
    out = jnp.dot(w2t_ref[...], h, preferred_element_type=jnp.float32) + b2_ref[...]
    out_ref[0] = out.astype(out_ref.dtype)                          # (K, TILE_M)


@jax.jit
def _det_head_fused(x_cat, w1t, bias_col, w2t, b2_col):
    """x_cat: (N, Cin, HW_total) -> (N, K, HW_total) f32, all levels fused."""
    N, Cin, HW = x_cat.shape
    Ch = w1t.shape[0]
    K = w2t.shape[0]

    tile_m = min(DEFAULT_TILE_M, _round_up(HW, 128))
    m_pad = _round_up(HW, tile_m)
    if m_pad != HW:
        x_cat = jnp.pad(x_cat, ((0, 0), (0, 0), (0, m_pad - HW)))
    x_cat = x_cat.astype(jnp.bfloat16)  # halve input HBM traffic

    grid = (N, m_pad // tile_m)
    cost = pl.CostEstimate(
        flops=2 * N * m_pad * (Cin * Ch + Ch * K),
        transcendentals=0,
        bytes_accessed=(N * Cin * m_pad * 2          # bf16 input
                        + N * K * m_pad * 4          # f32 output
                        + Ch * Cin * 2 + Ch * 4 + K * Ch * 4 + K * 4),
    )

    y = pl.pallas_call(
        det_head_kernel,
        out_shape=jax.ShapeDtypeStruct((N, K, m_pad), jnp.float32),
        grid=grid,
        in_specs=[
            pl.BlockSpec((1, Cin, tile_m), lambda n, i: (n, 0, i)),
            pl.BlockSpec((Ch, Cin), lambda n, i: (0, 0)),
            pl.BlockSpec((Ch, 1), lambda n, i: (0, 0)),
            pl.BlockSpec((K, Ch), lambda n, i: (0, 0)),
            pl.BlockSpec((K, 1), lambda n, i: (0, 0)),
        ],
        out_specs=pl.BlockSpec((1, K, tile_m), lambda n, i: (n, 0, i)),
        compiler_params=pltpu.CompilerParams(
            dimension_semantics=("parallel", "parallel")),
        cost_estimate=cost,
    )(x_cat, w1t, bias_col, w2t, b2_col)

    return y[:, :, :HW]


class BaseDetHeadPallas:
    """JAX/Pallas counterpart of BaseDetHead with a minimal concrete forward."""

    def __init__(self, num_classes, in_channels, channels,
                 strides=(8, 16, 32), depthwise=False):
        self.num_classes = num_classes
        self.in_channels = in_channels
        self.channels = channels
        self.strides = tuple(strides)
        self.depthwise = depthwise  # ignored: pointwise realization only

        # Deterministic synthetic parameters (no checkpoint load).
        k = jax.random.PRNGKey(0)
        k1, k2, k3, k4, k5, k6 = jax.random.split(k, 6)
        self.w1 = jax.random.normal(k1, (in_channels, channels), jnp.float32) * 0.1
        self.w2 = jax.random.normal(k2, (channels, num_classes), jnp.float32) * 0.1
        self.b2 = jax.random.normal(k3, (1, num_classes), jnp.float32) * 0.01
        # BatchNorm (eval mode) folded into scale / bias.
        gamma = 1.0 + 0.1 * jax.random.normal(k4, (channels,), jnp.float32)
        beta = 0.1 * jax.random.normal(k5, (channels,), jnp.float32)
        running_mean = 0.1 * jax.random.normal(k6, (channels,), jnp.float32)
        running_var = jnp.ones((channels,), jnp.float32)
        eps = 1e-5
        scale = gamma / jnp.sqrt(running_var + eps)
        bias = beta - running_mean * scale
        self.scale = scale.reshape(1, channels)   # kept for the f32 reference
        self.bias = bias.reshape(1, channels)

        # Kernel-layout parameters: BN scale folded into w1, transposed so the
        # channel axis is the contraction/sublane axis, bf16 for HBM traffic.
        self.w1t_folded = (self.w1 * self.scale).T.astype(jnp.bfloat16)   # (Ch, Cin)
        self.bn_bias_col = bias.reshape(channels, 1)                      # (Ch, 1) f32
        self.w2t = self.w2.T                                              # (K, Ch) f32
        self.b2_col = self.b2.reshape(num_classes, 1)                     # (K, 1) f32

    def __call__(self, xs):
        """xs: list of NCHW feature maps (one per stride level).

        Returns a list of NCHW maps with num_classes channels each.
        """
        N = xs[0].shape[0]
        shapes = []
        flats = []
        for x in xs:
            n, c, h, w = x.shape
            assert n == N and c == self.in_channels
            shapes.append((h, w))
            flats.append(x.reshape(N, c, h * w))      # NCHW -> (N, C, H*W), no transpose
        x_cat = jnp.concatenate(flats, axis=2)        # (N, Cin, sum H*W) — one call

        y = _det_head_fused(x_cat, self.w1t_folded, self.bn_bias_col,
                            self.w2t, self.b2_col)    # (N, K, sum H*W)

        outs = []
        off = 0
        for (h, w) in shapes:
            hw = h * w
            outs.append(y[:, :, off:off + hw].reshape(N, self.num_classes, h, w))
            off += hw
        return outs


def _reference(xs, head):
    """Pure-JAX f32 reference (un-folded BN, original math order)."""
    outs = []
    for x in xs:
        N, C, H, W = x.shape
        xf = jnp.transpose(x, (0, 2, 3, 1)).reshape(-1, C)
        h = xf @ head.w1
        h = h * head.scale + head.bias
        h = jnp.maximum(h, 0.0)
        y = h @ head.w2 + head.b2
        y = y.reshape(N, H, W, head.num_classes)
        outs.append(jnp.transpose(y, (0, 3, 1, 2)))
    return outs


if __name__ == "__main__":
    num_classes = 8
    in_channels = 4
    channels = 32
    batch = 2
    base_spatial = 16  # feature maps at strides [8, 16, 32] -> 16, 8, 4

    key = jax.random.PRNGKey(0)
    keys = jax.random.split(key, 3)
    spatials = [base_spatial, base_spatial // 2, base_spatial // 4]
    xs = [
        jax.random.normal(keys[i], (batch, in_channels, s, s), jnp.float32)
        for i, s in enumerate(spatials)
    ]

    head = BaseDetHeadPallas(num_classes, in_channels, channels)

    outs = head(xs)
    outs = [jax.block_until_ready(o) for o in outs]

    refs = _reference(xs, head)
    for o, r in zip(outs, refs):
        assert o.shape == r.shape and o.dtype == jnp.float32
        # bf16 input/weight quantization -> loose-but-safe tolerance.
        assert jnp.allclose(o, r, atol=2e-2, rtol=2e-2)

    print("KERNEL_OK")
</pallas_src>

<mosaic_0001>
module attributes {stable_mosaic.version = 11 : i64} {
  func.func @det_head_kernel(%arg0: i32, %arg1: i32, %arg2: memref<1x4x384xbf16, #tpu.memory_space<vmem>>, %arg3: memref<32x4xbf16, #tpu.memory_space<vmem>>, %arg4: memref<32x1xf32, #tpu.memory_space<vmem>>, %arg5: memref<8x32xf32, #tpu.memory_space<vmem>>, %arg6: memref<8x1xf32, #tpu.memory_space<vmem>>, %arg7: memref<1x8x384xf32, #tpu.memory_space<vmem>>) attributes {dimension_semantics = [#tpu.dimension_semantics<parallel>, #tpu.dimension_semantics<parallel>], iteration_bounds = array<i64: 2, 1>, scalar_prefetch = 0 : i64, scratch_operands = 0 : i64, tpu.core_type = #tpu.core_type<tc>, window_params = [{transform_indices = @transform_0, window_bounds = array<i64: 1, 4, 384>}, {pipeline_mode = #tpu.pipeline_mode<synchronous>, transform_indices = @transform_1, window_bounds = array<i64: 32, 4>}, {pipeline_mode = #tpu.pipeline_mode<synchronous>, transform_indices = @transform_2, window_bounds = array<i64: 32, 1>}, {pipeline_mode = #tpu.pipeline_mode<synchronous>, transform_indices = @transform_3, window_bounds = array<i64: 8, 32>}, {pipeline_mode = #tpu.pipeline_mode<synchronous>, transform_indices = @transform_4, window_bounds = array<i64: 8, 1>}, {transform_indices = @transform_5, window_bounds = array<i64: 1, 8, 384>}]} {
    %c0 = arith.constant 0 : index
    %c0_0 = arith.constant 0 : index
    %c0_1 = arith.constant 0 : index
    %0 = vector.load %arg2[%c0, %c0_0, %c0_1] : memref<1x4x384xbf16, #tpu.memory_space<vmem>>, vector<1x4x384xbf16>
    %1 = vector.shape_cast %0 : vector<1x4x384xbf16> to vector<4x384xbf16>
    %c0_2 = arith.constant 0 : index
    %c0_3 = arith.constant 0 : index
    %2 = vector.load %arg3[%c0_2, %c0_3] : memref<32x4xbf16, #tpu.memory_space<vmem>>, vector<32x4xbf16>
    %cst = arith.constant dense<0.000000e+00> : vector<32x384xf32>
    %3 = tpu.matmul %2, %1, %cst {dimension_numbers = #tpu.dot_dimension_numbers<[1], [0], [0], [1], [0, 0, 1, 1], [], []>} : vector<32x4xbf16>, vector<4x384xbf16>, vector<32x384xf32> -> vector<32x384xf32>
    %c0_4 = arith.constant 0 : index
    %c0_5 = arith.constant 0 : index
    %4 = vector.load %arg4[%c0_4, %c0_5] : memref<32x1xf32, #tpu.memory_space<vmem>>, vector<32x1xf32>
    %5 = vector.broadcast %4 : vector<32x1xf32> to vector<32x384xf32>
    %6 = arith.addf %3, %5 : vector<32x384xf32>
    %cst_6 = arith.constant 0.000000e+00 : f32
    %7 = vector.broadcast %cst_6 : f32 to vector<32x384xf32>
    %8 = arith.maximumf %6, %7 : vector<32x384xf32>
    %c0_7 = arith.constant 0 : index
    %c0_8 = arith.constant 0 : index
    %9 = vector.load %arg5[%c0_7, %c0_8] : memref<8x32xf32, #tpu.memory_space<vmem>>, vector<8x32xf32>
    %cst_9 = arith.constant dense<0.000000e+00> : vector<8x384xf32>
    %10 = tpu.matmul %9, %8, %cst_9 {dimension_numbers = #tpu.dot_dimension_numbers<[1], [0], [0], [1], [0, 0, 1, 1], [], []>} : vector<8x32xf32>, vector<32x384xf32>, vector<8x384xf32> -> vector<8x384xf32>
    %c0_10 = arith.constant 0 : index
    %c0_11 = arith.constant 0 : index
    %11 = vector.load %arg6[%c0_10, %c0_11] : memref<8x1xf32, #tpu.memory_space<vmem>>, vector<8x1xf32>
    %12 = vector.broadcast %11 : vector<8x1xf32> to vector<8x384xf32>
    %13 = arith.addf %10, %12 : vector<8x384xf32>
    %c0_12 = arith.constant 0 : index
    %c0_13 = arith.constant 0 : index
    %c0_14 = arith.constant 0 : index
    %14 = vector.load %arg7[%c0_12, %c0_13, %c0_14] : memref<1x8x384xf32, #tpu.memory_space<vmem>>, vector<1x8x384xf32>
    %15 = vector.shape_cast %14 : vector<1x8x384xf32> to vector<8x384xf32>
    %16 = vector.shape_cast %13 : vector<8x384xf32> to vector<1x8x384xf32>
    tpu.vector_store %arg7[%c0_12, %c0_13, %c0_14], %16 {strides = array<i32>} : memref<1x8x384xf32, #tpu.memory_space<vmem>>, vector<1x8x384xf32>,
    return
  }
  func.func @transform_0(%arg0: i32, %arg1: i32) -> (i32, i32, i32) {
    %c0_i32 = arith.constant 0 : i32
    %c0_i32_0 = arith.constant 0 : i32
    return %arg0, %c0_i32, %arg1 : i32, i32, i32
  }
  func.func @transform_1(%arg0: i32, %arg1: i32) -> (i32, i32) {
    %c0_i32 = arith.constant 0 : i32
    %c0_i32_0 = arith.constant 0 : i32
    %c0_i32_1 = arith.constant 0 : i32
    return %c0_i32, %c0_i32_0 : i32, i32
  }
  func.func @transform_2(%arg0: i32, %arg1: i32) -> (i32, i32) {
    %c0_i32 = arith.constant 0 : i32
    %c0_i32_0 = arith.constant 0 : i32
    %c0_i32_1 = arith.constant 0 : i32
    return %c0_i32, %c0_i32_0 : i32, i32
  }
  func.func @transform_3(%arg0: i32, %arg1: i32) -> (i32, i32) {
    %c0_i32 = arith.constant 0 : i32
    %c0_i32_0 = arith.constant 0 : i32
    %c0_i32_1 = arith.constant 0 : i32
    return %c0_i32, %c0_i32_0 : i32, i32
  }
  func.func @transform_4(%arg0: i32, %arg1: i32) -> (i32, i32) {
    %c0_i32 = arith.constant 0 : i32
    %c0_i32_0 = arith.constant 0 : i32
    %c0_i32_1 = arith.constant 0 : i32
    return %c0_i32, %c0_i32_0 : i32, i32
  }
  func.func @transform_5(%arg0: i32, %arg1: i32) -> (i32, i32, i32) {
    %c0_i32 = arith.constant 0 : i32
    %c0_i32_0 = arith.constant 0 : i32
    return %arg0, %c0_i32, %arg1 : i32, i32, i32
  }
}

</mosaic_0001>

<llo_original>
// kernel: _det_head_fused.1
$region0: #{_det_head_fused.1}
  #allocation0 [shape = 'u32[]', space=smem, size = 0x4, offset = 0x4, fixed_abs, tag = 'smem constant byte address 0x4 - core index']
  #allocation1 [shape = 'u32[144,128]{1,0:T(1,128)}', space=vmem, size = 0x12000, scoped, tag = 'internal scratch']
  %s0 = inlined_call_operand.vmem [shape: bf16[2,4,384], index: 0, kind: input, shape index: {}]
  %s1 = inlined_call_operand.vmem [shape: bf16[32,4], index: 1, kind: input, shape index: {}]
  %s2 = inlined_call_operand.vmem [shape: f32[32,1], index: 2, kind: input, shape index: {}]
  %s3 = inlined_call_operand.vmem [shape: f32[8,32], index: 3, kind: input, shape index: {}]
  %s4 = inlined_call_operand.vmem [shape: f32[8,1], index: 4, kind: input, shape index: {}]
  %s5 = inlined_call_operand.hbm [shape: f32[2,8,384], index: 5, kind: output, shape index: {}]
  %s6 = sld [smem:[#allocation0]]
  $region53: #{_det_head_fused.1} parent=0
    _
  %s8 = ssub.s32 1, %s6
  %s9 = scalar_select 0, %s8, %s6
  $region1: #{_det_head_fused.1} parent=0
    #allocation2 [shape = 'u8[24576]{0}', space=vmem, size = 0x6000, scoped, tag = 'output window, operand 0']
    #allocation3 [shape = 's32[2]{0}', space=sflag, size = 0x8, scoped, tag = 'scoped memory for _det_head_fused.1']
    %10 = vsyncpa [#allocation3], 0
    %s11 = scalar_lea.sflag [#allocation3], 1
    %12 = vsyncpa %s11, 0
    loop: start=0, step=1, limit=4
    $region2: #{_det_head_fused.1} parent=1 // loop_pre_header
      _
    $region3: #{_det_head_fused.1} parent=1 // loop_header
      %s14 = sphi 0, %s18
      %p15 = scmp.ge.s32.totalorder %s14, 4
      %s21 = sphi 0, %s33
      %s22 = sphi 0, %s29
      %s23 = sphi 0, %s21
      %s24 = sphi 0, %s22
      %s25 = sphi 0, %s23
      %s26 = sphi 0, %s24
      %s38 = sphi 0, %s40
      %s41 = sphi 0, %s38
      %s42 = sphi 0, %s41
      %s58 = sphi 0, %s42
      %s62 = sphi 0, %s62
      %s64 = sphi 0, %s62
      %s65 = sphi 0, %s64
      %s79 = sphi 0, %s65
      %s83 = sphi 0, %s83
      %s85 = sphi 0, %s83
      %s86 = sphi 0, %s85
      %s100 = sphi 0, %s86
      %s104 = sphi 0, %s104
      %s106 = sphi 0, %s104
      %s107 = sphi 0, %s106
      %s121 = sphi 0, %s107
      %s125 = sphi 0, %s125
      %s127 = sphi 0, %s125
      %s128 = sphi 0, %s127
      %s142 = sphi 0, %s128
      %s150 = sphi 0, %s152
      %s153 = sphi 0, %s150
      %s154 = sphi 0, %s153
      %s170 = sphi 0, %s154
    $region4: #{_det_head_fused.1} parent=1 // loop_header_branch
      %17 = sbr.rel (%p15) target = $region8
    $region5: #{_det_head_fused.1} parent=1 // loop_body
      %s19 = ssub.s32 %s14, 1
      %s20 = ssub.s32 %s14, 2
      %s27 = sadd.s32 1, %s22
      %p28 = scmp.ge.s32.totalorder %s27, 1
      %s29 = scalar_select %p28, 0, %s27
      %s30 = sadd.s32 1, %s21
      %s31 = scalar_select %p28, %s30, %s21
      %p32 = scmp.ge.s32.totalorder %s31, 2
      %s33 = scalar_select %p32, 0, %s31
      %s34 = ssub.s32 %s21, %s33
      %s35 = ssub.s32 %s22, %s29
      %s36 = sor.u32 %s34, %s35
      %p37 = scmp.eq.s32.totalorder %s36, 0
      %s39 = sadd.s32 %s38, 1
      %s40 = scalar_select %p37, %s38, %s39
      %p43 = pneg %p37
      %p44 = scmp.eq.s32.totalorder %s14, 1
      %p45 = por %p43, %p44
      %p46 = scmp.ne.s32.totalorder %s38, %s41
      %p47 = scmp.eq.s32.totalorder %s14, 0
      %p48 = por %p46, %p47
      %p49 = scmp.ne.s32.totalorder %s38, %s41
      %p50 = scmp.eq.s32.totalorder %s19, 1
      %p51 = por %p49, %p50
      %p52 = scmp.ne.s32.totalorder %s41, %s42
      %p53 = scmp.eq.s32.totalorder %s19, 0
      %p54 = por %p52, %p53
      %p55 = scmp.ne.s32.totalorder %s41, %s42
      %p56 = scmp.eq.s32.totalorder %s20, 1
      %p57 = por %p55, %p56
      %p59 = scmp.ne.s32.totalorder %s42, %s58
      %p60 = scmp.eq.s32.totalorder %s20, 0
      %p61 = por %p59, %p60
      %s63 = sadd.s32 %s62, 1
      %p66 = scmp.eq.s32.totalorder %s14, 1
      %p67 = scmp.ne.s32.totalorder %s62, %s64
      %p68 = scmp.eq.s32.totalorder %s14, 0
      %p69 = por %p67, %p68
      %p70 = scmp.ne.s32.totalorder %s62, %s64
      %p71 = scmp.eq.s32.totalorder %s19, 1
      %p72 = por %p70, %p71
      %p73 = scmp.ne.s32.totalorder %s64, %s65
      %p74 = scmp.eq.s32.totalorder %s19, 0
      %p75 = por %p73, %p74
      %p76 = scmp.ne.s32.totalorder %s64, %s65
      %p77 = scmp.eq.s32.totalorder %s20, 1
      %p78 = por %p76, %p77
      %p80 = scmp.ne.s32.totalorder %s65, %s79
      %p81 = scmp.eq.s32.totalorder %s20, 0
      %p82 = por %p80, %p81
      %s84 = sadd.s32 %s83, 1
      %p87 = scmp.eq.s32.totalorder %s14, 1
      %p88 = scmp.ne.s32.totalorder %s83, %s85
      %p89 = scmp.eq.s32.totalorder %s14, 0
      %p90 = por %p88, %p89
      %p91 = scmp.ne.s32.totalorder %s83, %s85
      %p92 = scmp.eq.s32.totalorder %s19, 1
      %p93 = por %p91, %p92
      %p94 = scmp.ne.s32.totalorder %s85, %s86
      %p95 = scmp.eq.s32.totalorder %s19, 0
      %p96 = por %p94, %p95
      %p97 = scmp.ne.s32.totalorder %s85, %s86
      %p98 = scmp.eq.s32.totalorder %s20, 1
      %p99 = por %p97, %p98
      %p101 = scmp.ne.s32.totalorder %s86, %s100
      %p102 = scmp.eq.s32.totalorder %s20, 0
      %p103 = por %p101, %p102
      %s105 = sadd.s32 %s104, 1
      %p108 = scmp.eq.s32.totalorder %s14, 1
      %p109 = scmp.ne.s32.totalorder %s104, %s106
      %p110 = scmp.eq.s32.totalorder %s14, 0
      %p111 = por %p109, %p110
      %p112 = scmp.ne.s32.totalorder %s104, %s106
      %p113 = scmp.eq.s32.totalorder %s19, 1
      %p114 = por %p112, %p113
      %p115 = scmp.ne.s32.totalorder %s106, %s107
      %p116 = scmp.eq.s32.totalorder %s19, 0
      %p117 = por %p115, %p116
      %p118 = scmp.ne.s32.totalorder %s106, %s107
      %p119 = scmp.eq.s32.totalorder %s20, 1
      %p120 = por %p118, %p119
      %p122 = scmp.ne.s32.totalorder %s107, %s121
      %p123 = scmp.eq.s32.totalorder %s20, 0
      %p124 = por %p122, %p123
      %s126 = sadd.s32 %s125, 1
      %p129 = scmp.eq.s32.totalorder %s14, 1
      %p130 = scmp.ne.s32.totalorder %s125, %s127
      %p131 = scmp.eq.s32.totalorder %s14, 0
      %p132 = por %p130, %p131
      %p133 = scmp.ne.s32.totalorder %s125, %s127
      %p134 = scmp.eq.s32.totalorder %s19, 1
      %p135 = por %p133, %p134
      %p136 = scmp.ne.s32.totalorder %s127, %s128
      %p137 = scmp.eq.s32.totalorder %s19, 0
      %p138 = por %p136, %p137
      %p139 = scmp.ne.s32.totalorder %s127, %s128
      %p140 = scmp.eq.s32.totalorder %s20, 1
      %p141 = por %p139, %p140
      %p143 = scmp.ne.s32.totalorder %s128, %s142
      %p144 = scmp.eq.s32.totalorder %s20, 0
      %p145 = por %p143, %p144
      %s146 = ssub.s32 %s21, %s33
      %s147 = ssub.s32 %s22, %s29
      %s148 = sor.u32 %s146, %s147
      %p149 = scmp.eq.s32.totalorder %s148, 0
      %s151 = sadd.s32 %s150, 1
      %s152 = scalar_select %p149, %s150, %s151
      %p155 = pneg %p149
      %p156 = scmp.eq.s32.totalorder %s14, 1
      %p157 = por %p155, %p156
      %p158 = scmp.ne.s32.totalorder %s150, %s153
      %p159 = scmp.eq.s32.totalorder %s14, 0
      %p160 = por %p158, %p159
      %p161 = scmp.ne.s32.totalorder %s150, %s153
      %p162 = scmp.eq.s32.totalorder %s19, 1
      %p163 = por %p161, %p162
      %p164 = scmp.ne.s32.totalorder %s153, %s154
      %p165 = scmp.eq.s32.totalorder %s19, 0
      %p166 = por %p164, %p165
      %p167 = scmp.ne.s32.totalorder %s153, %s154
      %p168 = scmp.eq.s32.totalorder %s20, 1
      %p169 = por %p167, %p168
      %p171 = scmp.ne.s32.totalorder %s154, %s170
      %p172 = scmp.eq.s32.totalorder %s20, 0
      %p173 = por %p171, %p172
      %p174 = scmp.le.s32.totalorder 1, %s14
      %p175 = scmp.lt.s32.totalorder %s14, 3
      %p176 = pnand %p174, %p175
      %p177 = pneg %p176
      // Predicated region
      $region9: #{_det_head_fused.1} parent=5 // pred_check
        _
      $region10: #{_det_head_fused.1} parent=5 // pred_check_branch
        %179 = sbr.rel (%p176) target = $region12
      $region11: #{_det_head_fused.1} parent=5 // pred_region
        %s180 = ssub.s32 %s14, 1
        // Predicated region
        $region13: #{_det_head_fused.1} parent=11 // pred_check
          %p181 = pneg %p75
        $region14: #{_det_head_fused.1} parent=11 // pred_check_branch
          %183 = sbr.rel (%p181) target = $region16
        $region15: #{_det_head_fused.1} parent=11 // pred_region
          _
        $region16: #{_det_head_fused.1} parent=11 // pred_fallthru
          _
        // Predicated region
        $region17: #{_det_head_fused.1} parent=11 // pred_check
          %p184 = pneg %p96
        $region18: #{_det_head_fused.1} parent=11 // pred_check_branch
          %186 = sbr.rel (%p184) target = $region20
        $region19: #{_det_head_fused.1} parent=11 // pred_region
          _
        $region20: #{_det_head_fused.1} parent=11 // pred_fallthru
          _
        // Predicated region
        $region21: #{_det_head_fused.1} parent=11 // pred_check
          %p187 = pneg %p117
        $region22: #{_det_head_fused.1} parent=11 // pred_check_branch
          %189 = sbr.rel (%p187) target = $region24
        $region23: #{_det_head_fused.1} parent=11 // pred_region
          _
        $region24: #{_det_head_fused.1} parent=11 // pred_fallthru
          _
        // Predicated region
        $region25: #{_det_head_fused.1} parent=11 // pred_check
          %p190 = pneg %p138
        $region26: #{_det_head_fused.1} parent=11 // pred_check_branch
          %192 = sbr.rel (%p190) target = $region28
        $region27: #{_det_head_fused.1} parent=11 // pred_region
          _
        $region28: #{_det_head_fused.1} parent=11 // pred_fallthru
          _
      $region12: #{_det_head_fused.1} parent=5 // pred_fallthru
        _
      %p193 = scmp.lt.s32.totalorder %s14, 2
      // Predicated region
      $region29: #{_det_head_fused.1} parent=5 // pred_check
        %p194 = pneg %p193
      $region30: #{_det_head_fused.1} parent=5 // pred_check_branch
        %196 = sbr.rel (%p194) target = $region32
      $region31: #{_det_head_fused.1} parent=5 // pred_region
        // Predicated region
        $region33: #{_det_head_fused.1} parent=31 // pred_check
          %p197 = pneg %p48
        $region34: #{_det_head_fused.1} parent=31 // pred_check_branch
          %199 = sbr.rel (%p197) target = $region36
        $region35: #{_det_head_fused.1} parent=31 // pred_region
          %s200 = smul.u32 3, %s22
          %p201 = scmp.lt.s32.totalorder %s21, 1
          %s202 = scalar_select %p201, %s21, 1
          %p203 = scmp.lt.s32.totalorder %s200, 2
          %s204 = scalar_select %p203, %s200, 2
          %s205 = smul.addr %s202, 3
          %s206 = sadd.s32 %s204, %s205
          %s207 = smul.addr %s206, 2
          %s208 = scalar_lea.vmem %s0, %s207
          %s209 = smul.u32 3, %s22
        $region36: #{_det_head_fused.1} parent=31 // pred_fallthru
          _
      $region32: #{_det_head_fused.1} parent=5 // pred_fallthru
        _
      %p210 = scmp.le.s32.totalorder 1, %s14
      %p211 = scmp.lt.s32.totalorder %s14, 3
      %p212 = pnand %p210, %p211
      %p213 = pneg %p212
      // Predicated region
      $region37: #{_det_head_fused.1} parent=5 // pred_check
        _
      $region38: #{_det_head_fused.1} parent=5 // pred_check_branch
        %215 = sbr.rel (%p212) target = $region40
      $region39: #{_det_head_fused.1} parent=5 // pred_region
        %s216 = ssub.s32 %s14, 1
        %s217 = smul.u32 3, %s24
        %p218 = scmp.lt.s32.totalorder %s23, 1
        %s219 = scalar_select %p218, %s23, 1
        %p220 = scmp.lt.s32.totalorder %s217, 2
        %s221 = scalar_select %p220, %s217, 2
        %s222 = smul.addr %s219, 3
        %s223 = sadd.s32 %s221, %s222
        %s224 = smul.addr %s223, 2
        %s225 = scalar_lea.vmem %s0, %s224
        %p226 = pneg %p54
        %p227 = pneg %p51
        %p228 = pneg %p75
        %p229 = pneg %p72
        %p230 = pneg %p96
        %p231 = pneg %p93
        %p232 = pneg %p117
        %p233 = pneg %p114
        %p234 = pneg %p138
        %p235 = pneg %p135
        %p236 = pneg %p166
        %p237 = pneg %p163
        %s238 = sand.u32 %s153, 1
        %s239 = scalar_lea.sflag [#allocation3], %s238
        %s240 = sand.u32 %s153, 1
        %s241 = smul.addr %s240, 24
        %s242 = scalar_lea.vmem [#allocation2], %s241
        %s243 = smul.u32 3, %s24
        %p244 = scmp.lt.s32.totalorder %s23, 1
        %s245 = scalar_select %p244, %s23, 1
        %p246 = scmp.lt.s32.totalorder %s243, 2
        %s247 = scalar_select %p246, %s243, 2
        %s248 = smul.addr %s245, 3
        %s249 = sadd.s32 %s247, %s248
        %s250 = smul.addr %s249, 2
        %s251 = scalar_lea.vmem %s0, %s250
        %s252 = smul.u32 3, %s24
        %s253 = smul.u32 3, %s24
        %v255 = vld [vmem:[%s251] sm:$0x3f]
        %v256 = vld [vmem:[%s1] sm:$0xf]
        %v257 = vld [vmem:[%s1 + $0x4] sm:$0xf]
        %v258 = vld [vmem:[%s1 + $0x8] sm:$0xf]
        %v259 = vld [vmem:[%s1 + $0xc] sm:$0xf]
        %v260 = vld [vmem:[%s2] sm:$0xff]
        %v261 = vld [vmem:[%s2 + $0x8] sm:$0xff]
        %v262 = vld [vmem:[%s2 + $0x10] sm:$0xff]
        %v263 = vld [vmem:[%s2 + $0x18] sm:$0xff]
        %265 = vset.pattern.permute.xlu0 0
        %266 = vperm.xlu0 %265, %v260
        %v267 = vpop.permute.xlu0 %266
        %270 = vset.pattern.permute.xlu0 0
        %271 = vperm.xlu0 %270, %v261
        %v272 = vpop.permute.xlu0 %271
        %275 = vset.pattern.permute.xlu0 0
        %276 = vperm.xlu0 %275, %v262
        %v277 = vpop.permute.xlu0 %276
        %280 = vset.pattern.permute.xlu0 0
        %281 = vperm.xlu0 %280, %v263
        %v282 = vpop.permute.xlu0 %281
        %v288 = vunpack.c.l.b16 %v256
        %v289 = vunpack.c.l.b16 %v257
        %v290 = vunpack.c.l.b16 %v258
        %v291 = vunpack.c.l.b16 %v259
        %v292 = vpack.c.b16 %v289, %v288
        %v293 = vpack.c.b16 %v291, %v290
        %v295 = vcombine.high %v255, %v255
        %v297 = vunpack.c.l.s4 1983009808
        %v298 = vunpack.c.0.s8 %v297
        %v299 = vlaneseq
        %v300 = vshrl.u32 %v299, 7
        %v301 = vsub.s32 %v298, %v300
        %v302 = vrot.slane %v255, %v301
        %v304 = vunpack.c.l.s4 1983009808
        %v305 = vunpack.c.0.s8 %v304
        %v306 = vlaneseq
        %v307 = vshrl.u32 %v306, 7
        %v308 = vsub.s32 %v305, %v307
        %v309 = vrot.slane %v295, %v308
        %v310 = vcombine.high %v302, %v302
        %vm311 = vcmask 31744
        %v313 = vsel %vm311, %v292, 0
        %v316 = vsel %vm311, %v293, 0
        %vm318 = vcmask 1041408
        %v320 = vsel %vm318, %v302, 0
        %v323 = vsel %vm318, %v310, 0
        %v326 = vsel %vm318, %v309, 0
        %328 = vmatprep.subr.bf16.mxu0 %v323
        %329 = vmatpush1.bf16.msra.mxu0 %v320
        %330 = vmatprep.subr.bf16.mxu0 0
        %331 = vmatpush1.bf16.msra.mxu0 0
        %332 = vmatprep.subr.bf16.mxu0 0
        %333 = vmatpush1.bf16.msra.mxu0 0
        %334 = vmatprep.subr.bf16.mxu0 0
        %335 = vmatpush1.bf16.msra.mxu0 0
        %336 = vmatprep.subr.bf16.mxu0 0
        %337 = vmatpush1.bf16.msra.mxu0 0
        %338 = vmatprep.subr.bf16.mxu0 0
        %339 = vmatpush1.bf16.msra.mxu0 0
        %340 = vmatprep.subr.bf16.mxu0 0
        %341 = vmatpush1.bf16.msra.mxu0 0
        %342 = vmatprep.subr.bf16.mxu0 0
        %343 = vmatpush1.bf16.msra.mxu0 0
        %344 = vmatprep.subr.bf16.mxu0 0
        %345 = vmatpush1.bf16.msra.mxu0 0
        %346 = vmatprep.subr.bf16.mxu0 0
        %347 = vmatpush1.bf16.msra.mxu0 0
        %348 = vmatprep.subr.bf16.mxu0 0
        %349 = vmatpush1.bf16.msra.mxu0 0
        %350 = vmatprep.subr.bf16.mxu0 0
        %351 = vmatpush1.bf16.msra.mxu0 0
        %352 = vmatprep.subr.bf16.mxu0 0
        %353 = vmatpush1.bf16.msra.mxu0 0
        %354 = vmatprep.subr.bf16.mxu0 0
        %355 = vmatpush1.bf16.msra.mxu0 0
        %356 = vmatprep.subr.bf16.mxu0 0
        %357 = vmatpush1.bf16.msra.mxu0 0
        %358 = vmatprep.subr.bf16.mxu0 0
        %359 = vmatpush1.bf16.msra.mxu0 0
        %360 = vmatprep.mubr.bf16.mxu0 0
        %361 = vmatmul.mubr.bf16.gmra.mrb[0].mxu0 %v313
        %v362 = vpop.f32.mrb[0].mxu0
        %v363 = vadd.f32 %v267, %v362
        %v364 = vpop.f32.mrb[0].mxu0
        %v365 = vadd.f32 %v267, %v364
        %v366 = vpop.f32.mrb[0].mxu0
        %v367 = vadd.f32 %v272, %v366
        %v368 = vpop.f32.mrb[0].mxu0
        %v369 = vadd.f32 %v272, %v368
        %370 = vmatprep.mubr.bf16.mxu0 0
        %371 = vmatmul.mubr.bf16.gmra.mrb[0].mxu0 %v316
        %v372 = vpop.f32.mrb[0].mxu0
        %v373 = vadd.f32 %v277, %v372
        %v374 = vpop.f32.mrb[0].mxu0
        %v375 = vadd.f32 %v277, %v374
        %v376 = vpop.f32.mrb[0].mxu0
        %v377 = vadd.f32 %v282, %v376
        %v378 = vpop.f32.mrb[0].mxu0
        %v379 = vadd.f32 %v282, %v378
        %380 = vdwg.mxu0
        %381 = vmatprep.subr.bf16.mxu0 0
        %382 = vmatpush1.bf16.msra.mxu0 %v326
        %383 = vmatprep.subr.bf16.mxu0 0
        %384 = vmatpush1.bf16.msra.mxu0 0
        %385 = vmatprep.subr.bf16.mxu0 0
        %386 = vmatpush1.bf16.msra.mxu0 0
        %387 = vmatprep.subr.bf16.mxu0 0
        %388 = vmatpush1.bf16.msra.mxu0 0
        %389 = vmatprep.subr.bf16.mxu0 0
        %390 = vmatpush1.bf16.msra.mxu0 0
        %391 = vmatprep.subr.bf16.mxu0 0
        %392 = vmatpush1.bf16.msra.mxu0 0
        %393 = vmatprep.subr.bf16.mxu0 0
        %394 = vmatpush1.bf16.msra.mxu0 0
        %395 = vmatprep.subr.bf16.mxu0 0
        %396 = vmatpush1.bf16.msra.mxu0 0
        %397 = vmatprep.subr.bf16.mxu0 0
        %398 = vmatpush1.bf16.msra.mxu0 0
        %399 = vmatprep.subr.bf16.mxu0 0
        %400 = vmatpush1.bf16.msra.mxu0 0
        %401 = vmatprep.subr.bf16.mxu0 0
        %402 = vmatpush1.bf16.msra.mxu0 0
        %403 = vmatprep.subr.bf16.mxu0 0
        %404 = vmatpush1.bf16.msra.mxu0 0
        %405 = vmatprep.subr.bf16.mxu0 0
        %406 = vmatpush1.bf16.msra.mxu0 0
        %407 = vmatprep.subr.bf16.mxu0 0
        %408 = vmatpush1.bf16.msra.mxu0 0
        %409 = vmatprep.subr.bf16.mxu0 0
        %410 = vmatpush1.bf16.msra.mxu0 0
        %411 = vmatprep.subr.bf16.mxu0 0
        %412 = vmatpush1.bf16.msra.mxu0 0
        %413 = vmatprep.mubr.bf16.mxu0 0
        %414 = vmatmul.mubr.bf16.gmra.mrb[0].mxu0 %v313
        %v415 = vpop.f32.mrb[0].mxu0
        %v416 = vadd.f32 %v267, %v415
        %v417 = vpop.f32.mrb[0].mxu0
        %v418 = vpop.f32.mrb[0].mxu0
        %v419 = vadd.f32 %v272, %v418
        %v420 = vpop.f32.mrb[0].mxu0
        %421 = vmatprep.mubr.bf16.mxu0 0
        %422 = vmatmul.mubr.bf16.gmra.mrb[0].mxu0 %v316
        %v423 = vpop.f32.mrb[0].mxu0
        %v424 = vadd.f32 %v277, %v423
        %v425 = vpop.f32.mrb[0].mxu0
        %v426 = vpop.f32.mrb[0].mxu0
        %v427 = vadd.f32 %v282, %v426
        %v428 = vpop.f32.mrb[0].mxu0
        %429 = vdwg.mxu0
        %v430 = vmax.f32 %v363, 0.0
        %v431 = vmax.f32 %v365, 0.0
        %v432 = vmax.f32 %v416, 0.0
        %v433 = vmax.f32 %v367, 0.0
        %v434 = vmax.f32 %v369, 0.0
        %v435 = vmax.f32 %v419, 0.0
        %v436 = vmax.f32 %v373, 0.0
        %v437 = vmax.f32 %v375, 0.0
        %v438 = vmax.f32 %v424, 0.0
        %v439 = vmax.f32 %v377, 0.0
        %v440 = vmax.f32 %v379, 0.0
        %v441 = vmax.f32 %v427, 0.0
        %v442 = vld [vmem:[%s3] sm:$0xff]
        %v443 = vld [vmem:[%s4] sm:$0xff]
        %445 = vset.pattern.permute.xlu0 0
        %446 = vperm.xlu0 %445, %v443
        %v447 = vpop.permute.xlu0 %446
        %vm449 = vcmask 261120
        %v451 = vsel %vm449, %v442, 0
        %453 = vmatprep.subr.mxu0 %v431
        %454 = vmatpush1.msra.mxu0 %v430
        %455 = vmatprep.subr.mxu0 %v434
        %456 = vmatpush1.msra.mxu0 %v433
        %457 = vmatprep.subr.mxu0 %v437
        %458 = vmatpush1.msra.mxu0 %v436
        %459 = vmatprep.subr.mxu0 %v440
        %460 = vmatpush1.msra.mxu0 %v439
        %461 = vmatprep.subr.mxu0 0.0
        %462 = vmatpush1.msra.mxu0 0.0
        %463 = vmatprep.subr.mxu0 0.0
        %464 = vmatpush1.msra.mxu0 0.0
        %465 = vmatprep.subr.mxu0 0.0
        %466 = vmatpush1.msra.mxu0 0.0
        %467 = vmatprep.subr.mxu0 0.0
        %468 = vmatpush1.msra.mxu0 0.0
        %469 = vmatprep.subr.mxu0 0.0
        %470 = vmatpush1.msra.mxu0 0.0
        %471 = vmatprep.subr.mxu0 0.0
        %472 = vmatpush1.msra.mxu0 0.0
        %473 = vmatprep.subr.mxu0 0.0
        %474 = vmatpush1.msra.mxu0 0.0
        %475 = vmatprep.subr.mxu0 0.0
        %476 = vmatpush1.msra.mxu0 0.0
        %477 = vmatprep.subr.mxu0 0.0
        %478 = vmatpush1.msra.mxu0 0.0
        %479 = vmatprep.subr.mxu0 0.0
        %480 = vmatpush1.msra.mxu0 0.0
        %481 = vmatprep.subr.mxu0 0.0
        %482 = vmatpush1.msra.mxu0 0.0
        %483 = vmatprep.subr.mxu0 0.0
        %484 = vmatpush1.msra.mxu0 0.0
        %485 = vmatprep.subr.mxu0 0.0
        %486 = vmatpush1.msra.mxu0 0.0
        %487 = vmatprep.subr.mxu0 0.0
        %488 = vmatpush1.msra.mxu0 0.0
        %489 = vmatprep.subr.mxu0 0.0
        %490 = vmatpush1.msra.mxu0 0.0
        %491 = vmatprep.subr.mxu0 0.0
        %492 = vmatpush1.msra.mxu0 0.0
        %493 = vmatprep.subr.mxu0 0.0
        %494 = vmatpush1.msra.mxu0 0.0
        %495 = vmatprep.subr.mxu0 0.0
        %496 = vmatpush1.msra.mxu0 0.0
        %497 = vmatprep.subr.mxu0 0.0
        %498 = vmatpush1.msra.mxu0 0.0
        %499 = vmatprep.subr.mxu0 0.0
        %500 = vmatpush1.msra.mxu0 0.0
        %501 = vmatprep.subr.mxu0 0.0
        %502 = vmatpush1.msra.mxu0 0.0
        %503 = vmatprep.subr.mxu0 0.0
        %504 = vmatpush1.msra.mxu0 0.0
        %505 = vmatprep.subr.mxu0 0.0
        %506 = vmatpush1.msra.mxu0 0.0
        %507 = vmatprep.subr.mxu0 0.0
        %508 = vmatpush1.msra.mxu0 0.0
        %509 = vmatprep.subr.mxu0 0.0
        %510 = vmatpush1.msra.mxu0 0.0
        %511 = vmatprep.subr.mxu0 0.0
        %512 = vmatpush1.msra.mxu0 0.0
        %513 = vmatprep.subr.mxu0 0.0
        %514 = vmatpush1.msra.mxu0 0.0
        %515 = vmatprep.subr.mxu0 0.0
        %516 = vmatpush1.msra.mxu0 0.0
        %517 = vmatprep.mubr.f32.mxu0 0.0
        %518 = vmatmul.mubr.f32.gmra.mrb[0].mxu0 %v451
        %v519 = vpop.f32.mrb[0].mxu0
        %v520 = vadd.f32 %v447, %v519
        %v521 = vpop.f32.mrb[0].mxu0
        %v522 = vadd.f32 %v447, %v521
        %523 = vdwg.mxu0
        %524 = vmatprep.subr.mxu0 0.0
        %525 = vmatpush1.msra.mxu0 %v432
        %526 = vmatprep.subr.mxu0 0.0
        %527 = vmatpush1.msra.mxu0 %v435
        %528 = vmatprep.subr.mxu0 0.0
        %529 = vmatpush1.msra.mxu0 %v438
        %530 = vmatprep.subr.mxu0 0.0
        %531 = vmatpush1.msra.mxu0 %v441
        %532 = vmatprep.subr.mxu0 0.0
        %533 = vmatpush1.msra.mxu0 0.0
        %534 = vmatprep.subr.mxu0 0.0
        %535 = vmatpush1.msra.mxu0 0.0
        %536 = vmatprep.subr.mxu0 0.0
        %537 = vmatpush1.msra.mxu0 0.0
        %538 = vmatprep.subr.mxu0 0.0
        %539 = vmatpush1.msra.mxu0 0.0
        %540 = vmatprep.subr.mxu0 0.0
        %541 = vmatpush1.msra.mxu0 0.0
        %542 = vmatprep.subr.mxu0 0.0
        %543 = vmatpush1.msra.mxu0 0.0
        %544 = vmatprep.subr.mxu0 0.0
        %545 = vmatpush1.msra.mxu0 0.0
        %546 = vmatprep.subr.mxu0 0.0
        %547 = vmatpush1.msra.mxu0 0.0
        %548 = vmatprep.subr.mxu0 0.0
        %549 = vmatpush1.msra.mxu0 0.0
        %550 = vmatprep.subr.mxu0 0.0
        %551 = vmatpush1.msra.mxu0 0.0
        %552 = vmatprep.subr.mxu0 0.0
        %553 = vmatpush1.msra.mxu0 0.0
        %554 = vmatprep.subr.mxu0 0.0
        %555 = vmatpush1.msra.mxu0 0.0
        %556 = vmatprep.subr.mxu0 0.0
        %557 = vmatpush1.msra.mxu0 0.0
        %558 = vmatprep.subr.mxu0 0.0
        %559 = vmatpush1.msra.mxu0 0.0
        %560 = vmatprep.subr.mxu0 0.0
        %561 = vmatpush1.msra.mxu0 0.0
        %562 = vmatprep.subr.mxu0 0.0
        %563 = vmatpush1.msra.mxu0 0.0
        %564 = vmatprep.subr.mxu0 0.0
        %565 = vmatpush1.msra.mxu0 0.0
        %566 = vmatprep.subr.mxu0 0.0
        %567 = vmatpush1.msra.mxu0 0.0
        %568 = vmatprep.subr.mxu0 0.0
        %569 = vmatpush1.msra.mxu0 0.0
        %570 = vmatprep.subr.mxu0 0.0
        %571 = vmatpush1.msra.mxu0 0.0
        %572 = vmatprep.subr.mxu0 0.0
        %573 = vmatpush1.msra.mxu0 0.0
        %574 = vmatprep.subr.mxu0 0.0
        %575 = vmatpush1.msra.mxu0 0.0
        %576 = vmatprep.subr.mxu0 0.0
        %577 = vmatpush1.msra.mxu0 0.0
        %578 = vmatprep.subr.mxu0 0.0
        %579 = vmatpush1.msra.mxu0 0.0
        %580 = vmatprep.subr.mxu0 0.0
        %581 = vmatpush1.msra.mxu0 0.0
        %582 = vmatprep.subr.mxu0 0.0
        %583 = vmatpush1.msra.mxu0 0.0
        %584 = vmatprep.subr.mxu0 0.0
        %585 = vmatpush1.msra.mxu0 0.0
        %586 = vmatprep.subr.mxu0 0.0
        %587 = vmatpush1.msra.mxu0 0.0
        %588 = vmatprep.mubr.f32.mxu0 0.0
        %589 = vmatmul.mubr.f32.gmra.mrb[0].mxu0 %v451
        %v590 = vpop.f32.mrb[0].mxu0
        %v591 = vadd.f32 %v447, %v590
        %v592 = vpop.f32.mrb[0].mxu0
        %593 = vdwg.mxu0
        %594 = vst [vmem:[%s242] sm:$0xff] %v520
        %595 = vst [vmem:[%s242 + $0x8] sm:$0xff] %v522
        %596 = vst [vmem:[%s242 + $0x10] sm:$0xff] %v591
        %s597 = sand.u32 %s153, 1
        %s598 = scalar_lea.sflag [#allocation3], %s597
        %s599 = sand.u32 %s153, 1
        %s600 = smul.addr %s599, 24
        %s601 = scalar_lea.vmem [#allocation2], %s600
        // Predicated region
        $region41: #{_det_head_fused.1} parent=39 // pred_check
          %p602 = pneg %p163
        $region42: #{_det_head_fused.1} parent=39 // pred_check_branch
          %604 = sbr.rel (%p602) target = $region44
        $region43: #{_det_head_fused.1} parent=39 // pred_region
          %s605 = smul.u32 3, %s24
          %s607 = ssub.s32 384, 384
          %608 = vsyncadd %s598, %s607
          %s609 = smul.addr %s23, 3
          %s610 = sadd.s32 %s605, %s609
          %s611 = smul.addr %s610, 128
          %s612 = scalar_lea.hbm %s5, %s611
          %s614 = sshll.u32 %s601, 4
          %s615 = int_to_ptr.vmem [resolvable:$true] %s614
          %617 = dma.vmem_to_hbm [thread:$0]  %s615, 384, %s612, %s598
        $region44: #{_det_head_fused.1} parent=39 // pred_fallthru
          _
      $region40: #{_det_head_fused.1} parent=5 // pred_fallthru
        _
      %p618 = scmp.le.s32.totalorder 2, %s14
      // Predicated region
      $region45: #{_det_head_fused.1} parent=5 // pred_check
        %p619 = pneg %p618
      $region46: #{_det_head_fused.1} parent=5 // pred_check_branch
        %621 = sbr.rel (%p619) target = $region48
      $region47: #{_det_head_fused.1} parent=5 // pred_region
        %s622 = ssub.s32 %s14, 2
        // Predicated region
        $region49: #{_det_head_fused.1} parent=47 // pred_check
          %p623 = pneg %p169
        $region50: #{_det_head_fused.1} parent=47 // pred_check_branch
          %625 = sbr.rel (%p623) target = $region52
        $region51: #{_det_head_fused.1} parent=47 // pred_region
          %s626 = sand.u32 %s154, 1
          %s627 = scalar_lea.sflag [#allocation3], %s626
          %s628 = sand.u32 %s154, 1
          %s629 = smul.addr %s628, 24
          %s630 = scalar_lea.vmem [#allocation2], %s629
          %631 = dma.done %s627, 384
        $region52: #{_det_head_fused.1} parent=47 // pred_fallthru
          _
      $region48: #{_det_head_fused.1} parent=5 // pred_fallthru
        _
    $region6: #{_det_head_fused.1} parent=1 // loop_footer
      %s18 = sadd.s32 1, %s14
    $region7: #{_det_head_fused.1} parent=1 // loop_footer_branch
      %13 = sbr.rel target = $region3
    $region8: #{_det_head_fused.1} parent=1 // loop_exit
      _
    %632 = vsyncpa [#allocation3], 1
    %s633 = scalar_lea.sflag [#allocation3], 1
    %634 = vsyncpa %s633, 1

</llo_original>
